<compile_context>
chip_gen: v5e
topology: v5e:2x2
jax: 0.10.0
libtpu: 0.0.40
codegen_flags: <defaults>
</compile_context>

<pallas_src>
import math

import jax
import jax.numpy as jnp
from jax.experimental import pallas as pl
from jax.experimental.pallas import tpu as pltpu

_INV_SQRT_2PI = 1.0 / math.sqrt(2.0 * math.pi)


# ----------------------------------------------------------------------------
# Helpers (tiling / VMEM budget)
# ----------------------------------------------------------------------------
def _round_up(n, m):
    return ((n + m - 1) // m) * m


def _vmem_limit_bytes():
    cap = 64 * 1024 * 1024
    try:  # generation-aware: 64 MiB on v7x, 128 MiB on v5e/v6e
        cap = int(getattr(pltpu.get_tpu_info(), "vmem_capacity_bytes", cap))
    except Exception:
        pass
    return max(32 * 1024 * 1024, min(cap * 3 // 4, 96 * 1024 * 1024))


def _pick_seq_tile(n):
    # Prefer large tiles; pad the sequence axis rather than shrinking to tiny
    # divisors (8-row tiles run at ~30% of the HBM roofline).
    if n <= 512:
        return _round_up(n, 8)
    for t in (512, 256, 128):
        if n % t == 0:
            return t
    return 256  # pad up to a multiple of 256


def _pick_head_block(BH, TL, P, E, D, L, vmem_budget):
    """Heads-per-grid-step for the attention kernel (amortizes step overhead)."""
    def fits(g):
        inp = 2 * g * (2 * (TL * E + P * E + P * D) + P * 4)      # bf16 q/k/v + f32 1/sigma
        out = 2 * g * 4 * (TL * D + 2 * TL * L)                   # f32 out/series/prior
        return inp + out <= (vmem_budget * 3) // 4
    best = 1
    for g in range(min(BH, 8), 0, -1):
        if BH % g == 0 and fits(g):
            best = g
            break
    if BH // best < 2:  # keep >=2 steps on the parallel axis for megacore (v7x)
        for g in range(best - 1, 0, -1):
            if BH % g == 0 and fits(g):
                best = g
                break
    return best


# ----------------------------------------------------------------------------
# Head-split projection kernels (write (B, H, seq, dh) directly; no transposes)
# ----------------------------------------------------------------------------
def _proj_kernel(x_ref, w_ref, b_ref, y_ref):
    # x: (TM, d_model) f32; w: (d_model, dh) bf16 (pre-transposed at init); b: (1, dh) f32.
    y = jnp.dot(x_ref[...].astype(jnp.bfloat16), w_ref[...],
                preferred_element_type=jnp.float32) + b_ref[...]
    y_ref[...] = y.astype(y_ref.dtype)


def _qsig_proj_kernel(x_ref, wq_ref, bq_ref, ws_ref, bs_ref, q_ref, sig_ref):
    x = x_ref[...]                                               # (TM, d_model) f32
    q = jnp.dot(x.astype(jnp.bfloat16), wq_ref[...],
                preferred_element_type=jnp.float32) + bq_ref[...]
    q_ref[...] = q.astype(q_ref.dtype)
    # sigma head scalar kept fully in f32 (feeds sigmoid(5x)/3**x downstream).
    sig_ref[...] = jnp.sum(x * ws_ref[...], axis=-1, keepdims=True) + bs_ref[...]


def _project_heads(x, w, b, tile, vmem_bytes, out_dtype):
    """x: (B, P, dm) f32; w: (H, dm, dh) bf16; b: (H, 1, dh) f32 -> (B, H, P, dh)."""
    B, P, dm = x.shape
    H, _, dh = w.shape
    return pl.pallas_call(
        _proj_kernel,
        out_shape=jax.ShapeDtypeStruct((B, H, P, dh), out_dtype),
        grid_spec=pltpu.PrefetchScalarGridSpec(
            num_scalar_prefetch=0,
            grid=(B, P // tile, H),               # head innermost -> x block resident
            in_specs=[
                pl.BlockSpec((None, tile, dm), lambda b_, t, h: (b_, t, 0)),
                pl.BlockSpec((None, dm, dh), lambda b_, t, h: (h, 0, 0)),
                pl.BlockSpec((None, 1, dh), lambda b_, t, h: (h, 0, 0)),
            ],
            out_specs=pl.BlockSpec((None, None, tile, dh),
                                   lambda b_, t, h: (b_, h, t, 0)),
        ),
        compiler_params=pltpu.CompilerParams(
            dimension_semantics=("parallel", "parallel", "parallel"),
            vmem_limit_bytes=vmem_bytes),
    )(x, w, b)


def _project_q_sigma(x, wq, bq, ws, bs, tile, vmem_bytes):
    """Fused Q + sigma projection (both consume `queries`: single pass over x)."""
    B, P, dm = x.shape
    H, _, E = wq.shape
    return pl.pallas_call(
        _qsig_proj_kernel,
        out_shape=(jax.ShapeDtypeStruct((B, H, P, E), jnp.bfloat16),
                   jax.ShapeDtypeStruct((B, H, P, 1), jnp.float32)),
        grid_spec=pltpu.PrefetchScalarGridSpec(
            num_scalar_prefetch=0,
            grid=(B, P // tile, H),
            in_specs=[
                pl.BlockSpec((None, tile, dm), lambda b_, t, h: (b_, t, 0)),
                pl.BlockSpec((None, dm, E), lambda b_, t, h: (h, 0, 0)),
                pl.BlockSpec((None, 1, E), lambda b_, t, h: (h, 0, 0)),
                pl.BlockSpec((None, 1, dm), lambda b_, t, h: (h, 0, 0)),
                pl.BlockSpec((None, 1, 1), lambda b_, t, h: (h, 0, 0)),
            ],
            out_specs=[
                pl.BlockSpec((None, None, tile, E), lambda b_, t, h: (b_, h, t, 0)),
                pl.BlockSpec((None, None, tile, 1), lambda b_, t, h: (b_, h, t, 0)),
            ],
        ),
        compiler_params=pltpu.CompilerParams(
            dimension_semantics=("parallel", "parallel", "parallel"),
            vmem_limit_bytes=vmem_bytes),
    )(x, wq, bq, ws, bs)


# ----------------------------------------------------------------------------
# Output projection: reduce over heads on the grid (folds the head transpose)
# ----------------------------------------------------------------------------
def _out_proj_kernel(x_ref, w_ref, b_ref, y_ref, acc_ref):
    h = pl.program_id(2)

    @pl.when(h == 0)
    def _():
        acc_ref[...] = jnp.zeros_like(acc_ref)

    acc_ref[...] += jnp.dot(x_ref[...].astype(jnp.bfloat16), w_ref[...],
                            preferred_element_type=jnp.float32)

    @pl.when(h == pl.num_programs(2) - 1)
    def _():
        y_ref[...] = acc_ref[...] + b_ref[...]


def _out_projection(x, w, b, tile, vmem_bytes):
    """x: (B, H, P, D) f32; w: (H, D, dm) bf16; b: (1, dm) f32 -> (B, P, dm) f32."""
    B, H, P, D = x.shape
    dm = w.shape[-1]
    return pl.pallas_call(
        _out_proj_kernel,
        out_shape=jax.ShapeDtypeStruct((B, P, dm), jnp.float32),
        grid_spec=pltpu.PrefetchScalarGridSpec(
            num_scalar_prefetch=0,
            grid=(B, P // tile, H),               # heads = reduction axis (last)
            in_specs=[
                pl.BlockSpec((None, None, tile, D), lambda b_, t, h: (b_, h, t, 0)),
                pl.BlockSpec((None, D, dm), lambda b_, t, h: (h, 0, 0)),
                pl.BlockSpec((1, dm), lambda b_, t, h: (0, 0)),
            ],
            out_specs=pl.BlockSpec((None, tile, dm), lambda b_, t, h: (b_, t, 0)),
            scratch_shapes=[pltpu.VMEM((tile, dm), jnp.float32)],
        ),
        compiler_params=pltpu.CompilerParams(
            dimension_semantics=("parallel", "parallel", "arbitrary"),
            vmem_limit_bytes=vmem_bytes),
    )(x, w, b)


# ----------------------------------------------------------------------------
# AnomalyAttention kernel: G heads per step, bh-blocks outer / L-tiles inner
# ----------------------------------------------------------------------------
def _make_attn_kernel(E, L, P):
    scale = 1.0 / math.sqrt(E)
    padded = P != L

    def kernel(q_ref, k_ref, v_ref, isig_ref, out_ref, series_ref, prior_ref):
        li = pl.program_id(1)
        G, TL, _ = q_ref.shape
        S = k_ref.shape[1]                                  # == P

        q = q_ref[...]                                      # (G, TL, E) bf16
        k = k_ref[...]                                      # (G, S,  E) bf16  (resident)
        v = v_ref[...]                                      # (G, S,  D) bf16  (resident)

        scores = jnp.einsum("gte,gse->gts", q, k,
                            preferred_element_type=jnp.float32) * scale

        # Grid-invariant |i-j| table generated in-kernel (VPU filler, no HBM input).
        row_i = jax.lax.broadcasted_iota(jnp.int32, (TL, S), 0) + li * TL
        col_i = jax.lax.broadcasted_iota(jnp.int32, (TL, S), 1)
        if padded:                                          # mask padded key columns
            scores = jnp.where((col_i < L)[None], scores, -1e30)

        m = jnp.max(scores, axis=-1, keepdims=True)
        e = jnp.exp(scores - m)
        series = e * pl.reciprocal(jnp.sum(e, axis=-1, keepdims=True), approx=True)
        series_ref[...] = series[:, :, :L]
        out_ref[...] = jnp.einsum("gts,gsd->gtd", series.astype(v.dtype), v,
                                  preferred_element_type=jnp.float32)

        # prior = 1/(sqrt(2*pi)*sigma) * exp(-(i-j)^2 / (2*sigma^2)), sigma per (g,row).
        start = pl.multiple_of(li * TL, TL)
        inv_sig = isig_ref[:, pl.ds(start, TL), :]          # (G, TL, 1), resident input
        d = (row_i - col_i).astype(jnp.float32)
        prior = (_INV_SQRT_2PI * inv_sig) * jnp.exp(
            (-0.5 * d * d)[None] * (inv_sig * inv_sig))
        prior_ref[...] = prior[:, :, :L]

    return kernel


def _anomaly_attention(q, k, v, inv_sig, *, L, G, TL, vmem_bytes):
    """q/k: (BH, P, E) bf16; v: (BH, P, D) bf16; inv_sig: (BH, P, 1) f32."""
    BH, P, E = q.shape
    D = v.shape[-1]
    kernel = _make_attn_kernel(E, L, P)

    cost = pl.CostEstimate(
        flops=2 * BH * P * P * (E + D),
        transcendentals=2 * BH * P * P,
        bytes_accessed=(2 * BH * P * (2 * E + D) + 4 * BH * P          # reads
                        + 4 * BH * P * (D + 2 * L)),                   # writes
    )

    out_shapes = (
        jax.ShapeDtypeStruct((BH, P, D), jnp.float32),   # out
        jax.ShapeDtypeStruct((BH, P, L), jnp.float32),   # series
        jax.ShapeDtypeStruct((BH, P, L), jnp.float32),   # prior
    )
    grid_spec = pltpu.PrefetchScalarGridSpec(
        num_scalar_prefetch=0,
        grid=(BH // G, P // TL),                 # bh-blocks OUTER, L-tiles inner:
        in_specs=[                               # K/V/1-over-sigma stay VMEM-resident.
            pl.BlockSpec((G, TL, E), lambda g, t: (g, t, 0)),
            pl.BlockSpec((G, P, E), lambda g, t: (g, 0, 0)),
            pl.BlockSpec((G, P, D), lambda g, t: (g, 0, 0)),
            pl.BlockSpec((G, P, 1), lambda g, t: (g, 0, 0)),
        ],
        out_specs=[
            pl.BlockSpec((G, TL, D), lambda g, t: (g, t, 0)),
            pl.BlockSpec((G, TL, L), lambda g, t: (g, t, 0)),
            pl.BlockSpec((G, TL, L), lambda g, t: (g, t, 0)),
        ],
    )
    return pl.pallas_call(
        kernel,
        out_shape=out_shapes,
        grid_spec=grid_spec,
        compiler_params=pltpu.CompilerParams(
            dimension_semantics=("parallel", "parallel"),
            vmem_limit_bytes=vmem_bytes),
        cost_estimate=cost,
    )(q, k, v, inv_sig)


# ----------------------------------------------------------------------------
# AttentionLayer parameters / forward
# ----------------------------------------------------------------------------
def init_params(key, d_model, n_heads, d_keys=None, d_values=None):
    d_keys = d_keys or d_model // n_heads
    d_values = d_values or d_model // n_heads
    H, E, D = n_heads, d_keys, d_values

    def lin(k, dout, din):
        k1, k2 = jax.random.split(k)
        bound = 1.0 / math.sqrt(din)
        w = jax.random.uniform(k1, (dout, din), jnp.float32, -bound, bound)
        b = jax.random.uniform(k2, (dout,), jnp.float32, -bound, bound)
        return w, b

    ks = jax.random.split(key, 5)
    wq, bq = lin(ks[0], E * H, d_model)
    wk, bk = lin(ks[1], E * H, d_model)
    wv, bv = lin(ks[2], D * H, d_model)
    ws, bs = lin(ks[3], H, d_model)
    wo, bo = lin(ks[4], d_model, D * H)

    def head_layout(w, b, dh):
        # torch (H*dh, d_model) -> per-head pre-transposed (H, d_model, dh) bf16
        return (jnp.transpose(w.reshape(H, dh, d_model), (0, 2, 1)).astype(jnp.bfloat16),
                b.reshape(H, 1, dh))

    params = {
        "n_heads": H, "d_keys": E, "d_values": D,
        # torch-layout f32 weights (reference path)
        "q": (wq, bq), "k": (wk, bk), "v": (wv, bv), "sigma": (ws, bs), "out": (wo, bo),
    }
    params["kq_w"], params["kq_b"] = head_layout(wq, bq, E)
    params["kk_w"], params["kk_b"] = head_layout(wk, bk, E)
    params["kv_w"], params["kv_b"] = head_layout(wv, bv, D)
    params["ks_w"] = ws.reshape(H, 1, d_model)          # sigma weights stay f32
    params["ks_b"] = bs.reshape(H, 1, 1)
    # out projection: torch (d_model, H*D) -> (H, D, d_model) bf16
    params["ko_w"] = jnp.transpose(wo, (1, 0)).reshape(H, D, d_model).astype(jnp.bfloat16)
    params["ko_b"] = bo.reshape(1, d_model)
    return params


def attention_layer_forward(params, queries, keys, values, attn_mask=None):
    # attn_mask accepted for API parity; AnomalyAttention never uses it.
    del attn_mask
    # TODO(synk): self.norm (LayerNorm) exists in the PyTorch module but is unused
    # in forward -> intentionally omitted.
    B, L, d_model = queries.shape
    _, S, _ = keys.shape
    H, E, D = params["n_heads"], params["d_keys"], params["d_values"]
    assert S == L, "AnomalyAttention (window attention) requires L == S"

    TL = _pick_seq_tile(L)
    P = _round_up(L, TL)
    if P != L:
        pad = ((0, 0), (0, P - L), (0, 0))
        queries = jnp.pad(queries, pad)
        keys = jnp.pad(keys, pad)
        values = jnp.pad(values, pad)

    vmem = _vmem_limit_bytes()

    # Head-split projections (write (B, H, P, dh) directly; Q + sigma fused).
    q, sig_raw = _project_q_sigma(queries, params["kq_w"], params["kq_b"],
                                  params["ks_w"], params["ks_b"], TL, vmem)
    k = _project_heads(keys, params["kk_w"], params["kk_b"], TL, vmem, jnp.bfloat16)
    v = _project_heads(values, params["kv_w"], params["kv_b"], TL, vmem, jnp.bfloat16)

    # Sigma activation + exact 1/sigma in the wrapper (tiny elementwise over B*H*P):
    # removes narrow (TL,1) kernel stores and the approx-reciprocal error path.
    sig_act = jnp.power(3.0, jax.nn.sigmoid(5.0 * sig_raw) + 1e-5) - 1.0   # (B,H,P,1)
    inv_sig = 1.0 / sig_act

    BH = B * H
    G = _pick_head_block(BH, TL, P, E, D, L, vmem)
    out_bh, series_bh, prior_bh = _anomaly_attention(
        q.reshape(BH, P, E), k.reshape(BH, P, E), v.reshape(BH, P, D),
        inv_sig.reshape(BH, P, 1), L=L, G=G, TL=TL, vmem_bytes=vmem)

    y = _out_projection(out_bh.reshape(B, H, P, D), params["ko_w"], params["ko_b"],
                        TL, vmem)                                          # (B, P, dm)

    series = series_bh.reshape(B, H, P, L)
    prior = prior_bh.reshape(B, H, P, L)
    if P != L:
        y = y[:, :L]
        series = series[:, :, :L]
        prior = prior[:, :, :L]
        sig_act = sig_act[:, :, :L]
    sigma_out = jnp.broadcast_to(sig_act, (B, H, L, L))
    return y, series, prior, sigma_out


# ----------------------------------------------------------------------------
# Pure-JAX f32 reference (uses the torch-layout weights)
# ----------------------------------------------------------------------------
def reference_forward(params, queries, keys, values):
    B, L, d_model = queries.shape
    _, S, _ = keys.shape
    H, E, D = params["n_heads"], params["d_keys"], params["d_values"]

    def lin(x, wb):
        w, b = wb
        return x @ w.T + b

    q = lin(queries, params["q"]).reshape(B, L, H, E)
    k = lin(keys, params["k"]).reshape(B, S, H, E)
    v = lin(values, params["v"]).reshape(B, S, H, D)
    sigma = lin(queries, params["sigma"]).reshape(B, L, H)

    scale = 1.0 / math.sqrt(E)
    scores = jnp.einsum("blhe,bshe->bhls", q, k) * scale
    series = jax.nn.softmax(scores, axis=-1)
    out = jnp.einsum("bhls,bshd->blhd", series, v)

    sig = jnp.transpose(sigma, (0, 2, 1))
    sig = jax.nn.sigmoid(sig * 5.0) + 1e-5
    sig = jnp.power(3.0, sig) - 1.0
    sig = jnp.broadcast_to(sig[..., None], (B, H, L, S))
    ii = jnp.arange(L, dtype=jnp.float32)[:, None]
    jj = jnp.arange(S, dtype=jnp.float32)[None, :]
    dist = jnp.abs(ii - jj)
    prior = (1.0 / (math.sqrt(2.0 * math.pi) * sig)) * jnp.exp(
        -(dist ** 2) / (2.0 * sig ** 2))
    out = lin(out.reshape(B, L, H * D), params["out"])
    return out, series, prior, sig


# ----------------------------------------------------------------------------
if __name__ == "__main__":
    B, L = 2, 8
    d_model, n_heads = 32, 4

    key = jax.random.PRNGKey(0)
    kp, kq, kk, kv = jax.random.split(key, 4)
    params = init_params(kp, d_model, n_heads)

    queries = jax.random.normal(kq, (B, L, d_model), jnp.float32)
    keys = jax.random.normal(kk, (B, L, d_model), jnp.float32)
    values = jax.random.normal(kv, (B, L, d_model), jnp.float32)

    out, series, prior, sigma = attention_layer_forward(params, queries, keys, values, None)
    jax.block_until_ready((out, series, prior, sigma))

    r_out, r_series, r_prior, r_sigma = reference_forward(params, queries, keys, values)

    assert out.shape == (B, L, d_model)
    assert series.shape == (B, n_heads, L, L)
    assert prior.shape == (B, n_heads, L, L)
    assert sigma.shape == (B, n_heads, L, L)
    # Tolerances account for bf16 MXU operands (f32 accumulation) in the projection
    # and attention matmuls plus the EUP approx reciprocal in the softmax; the sigma
    # and prior paths are kept in f32, so their tolerances stay tight.
    assert jnp.allclose(out, r_out, atol=5e-2, rtol=5e-2)
    assert jnp.allclose(series, r_series, atol=2e-2, rtol=2e-2)
    assert jnp.allclose(prior, r_prior, atol=2e-3, rtol=2e-2)
    assert jnp.allclose(sigma, r_sigma, atol=1e-3, rtol=1e-3)

    print("KERNEL_OK")
</pallas_src>

<mosaic_0001>
module attributes {stable_mosaic.version = 11 : i64} {
  func.func @_qsig_proj_kernel(%arg0: i32, %arg1: i32, %arg2: i32, %arg3: memref<1x8x32xf32, #tpu.memory_space<vmem>>, %arg4: memref<1x32x8xbf16, #tpu.memory_space<vmem>>, %arg5: memref<1x1x8xf32, #tpu.memory_space<vmem>>, %arg6: memref<1x1x32xf32, #tpu.memory_space<vmem>>, %arg7: memref<1x1x1xf32, #tpu.memory_space<vmem>>, %arg8: memref<1x1x8x8xbf16, #tpu.memory_space<vmem>>, %arg9: memref<1x1x8x1xf32, #tpu.memory_space<vmem>>) attributes {dimension_semantics = [#tpu.dimension_semantics<parallel>, #tpu.dimension_semantics<parallel>, #tpu.dimension_semantics<parallel>], iteration_bounds = array<i64: 2, 1, 4>, scalar_prefetch = 0 : i64, scratch_operands = 0 : i64, tpu.core_type = #tpu.core_type<tc>, window_params = [{transform_indices = @transform_0, window_bounds = array<i64: 1, 8, 32>}, {transform_indices = @transform_1, window_bounds = array<i64: 1, 32, 8>}, {transform_indices = @transform_2, window_bounds = array<i64: 1, 1, 8>}, {transform_indices = @transform_3, window_bounds = array<i64: 1, 1, 32>}, {transform_indices = @transform_4, window_bounds = array<i64: 1, 1, 1>}, {transform_indices = @transform_5, window_bounds = array<i64: 1, 1, 8, 8>}, {transform_indices = @transform_6, window_bounds = array<i64: 1, 1, 8, 1>}]} {
    %c0 = arith.constant 0 : index
    %c0_0 = arith.constant 0 : index
    %c0_1 = arith.constant 0 : index
    %0 = vector.load %arg3[%c0, %c0_0, %c0_1] : memref<1x8x32xf32, #tpu.memory_space<vmem>>, vector<1x8x32xf32>
    %1 = vector.shape_cast %0 : vector<1x8x32xf32> to vector<8x32xf32>
    %2 = arith.truncf %1 : vector<8x32xf32> to vector<8x32xbf16>
    %c0_2 = arith.constant 0 : index
    %c0_3 = arith.constant 0 : index
    %c0_4 = arith.constant 0 : index
    %3 = vector.load %arg4[%c0_2, %c0_3, %c0_4] : memref<1x32x8xbf16, #tpu.memory_space<vmem>>, vector<1x32x8xbf16>
    %4 = vector.shape_cast %3 : vector<1x32x8xbf16> to vector<32x8xbf16>
    %cst = arith.constant dense<0.000000e+00> : vector<8x8xf32>
    %5 = tpu.matmul %2, %4, %cst {dimension_numbers = #tpu.dot_dimension_numbers<[1], [0], [0], [1], [0, 0, 1, 1], [], []>} : vector<8x32xbf16>, vector<32x8xbf16>, vector<8x8xf32> -> vector<8x8xf32>
    %c0_5 = arith.constant 0 : index
    %c0_6 = arith.constant 0 : index
    %c0_7 = arith.constant 0 : index
    %6 = vector.load %arg5[%c0_5, %c0_6, %c0_7] : memref<1x1x8xf32, #tpu.memory_space<vmem>>, vector<1x1x8xf32>
    %7 = vector.shape_cast %6 : vector<1x1x8xf32> to vector<1x8xf32>
    %8 = vector.broadcast %7 : vector<1x8xf32> to vector<8x8xf32>
    %9 = arith.addf %5, %8 : vector<8x8xf32>
    %10 = arith.truncf %9 : vector<8x8xf32> to vector<8x8xbf16>
    %c0_8 = arith.constant 0 : index
    %c0_9 = arith.constant 0 : index
    %c0_10 = arith.constant 0 : index
    %c0_11 = arith.constant 0 : index
    %11 = vector.load %arg8[%c0_8, %c0_9, %c0_10, %c0_11] : memref<1x1x8x8xbf16, #tpu.memory_space<vmem>>, vector<1x1x8x8xbf16>
    %12 = vector.shape_cast %11 : vector<1x1x8x8xbf16> to vector<8x8xbf16>
    %13 = vector.shape_cast %10 : vector<8x8xbf16> to vector<1x1x8x8xbf16>
    tpu.vector_store %arg8[%c0_8, %c0_9, %c0_10, %c0_11], %13 {strides = array<i32>} : memref<1x1x8x8xbf16, #tpu.memory_space<vmem>>, vector<1x1x8x8xbf16>,
    %c0_12 = arith.constant 0 : index
    %c0_13 = arith.constant 0 : index
    %c0_14 = arith.constant 0 : index
    %14 = vector.load %arg6[%c0_12, %c0_13, %c0_14] : memref<1x1x32xf32, #tpu.memory_space<vmem>>, vector<1x1x32xf32>
    %15 = vector.shape_cast %14 : vector<1x1x32xf32> to vector<1x32xf32>
    %16 = vector.broadcast %15 : vector<1x32xf32> to vector<8x32xf32>
    %17 = arith.mulf %1, %16 : vector<8x32xf32>
    %cst_15 = arith.constant dense<0.000000e+00> : vector<8xf32>
    %18 = vector.multi_reduction <add>, %17, %cst_15 [1] : vector<8x32xf32> to vector<8xf32>
    %19 = vector.shape_cast %18 : vector<8xf32> to vector<8x1xf32>
    %c0_16 = arith.constant 0 : index
    %c0_17 = arith.constant 0 : index
    %c0_18 = arith.constant 0 : index
    %20 = vector.load %arg7[%c0_16, %c0_17, %c0_18] : memref<1x1x1xf32, #tpu.memory_space<vmem>>, vector<1x1x1xf32>
    %21 = vector.shape_cast %20 : vector<1x1x1xf32> to vector<1x1xf32>
    %22 = vector.broadcast %21 : vector<1x1xf32> to vector<8x1xf32>
    %23 = arith.addf %19, %22 : vector<8x1xf32>
    %c0_19 = arith.constant 0 : index
    %c0_20 = arith.constant 0 : index
    %c0_21 = arith.constant 0 : index
    %c0_22 = arith.constant 0 : index
    %24 = vector.load %arg9[%c0_19, %c0_20, %c0_21, %c0_22] : memref<1x1x8x1xf32, #tpu.memory_space<vmem>>, vector<1x1x8x1xf32>
    %25 = vector.shape_cast %24 : vector<1x1x8x1xf32> to vector<8x1xf32>
    %26 = vector.shape_cast %23 : vector<8x1xf32> to vector<1x1x8x1xf32>
    tpu.vector_store %arg9[%c0_19, %c0_20, %c0_21, %c0_22], %26 {strides = array<i32>} : memref<1x1x8x1xf32, #tpu.memory_space<vmem>>, vector<1x1x8x1xf32>,
    return
  }
  func.func @transform_0(%arg0: i32, %arg1: i32, %arg2: i32) -> (i32, i32, i32) {
    %c0_i32 = arith.constant 0 : i32
    %c0_i32_0 = arith.constant 0 : i32
    return %arg0, %arg1, %c0_i32 : i32, i32, i32
  }
  func.func @transform_1(%arg0: i32, %arg1: i32, %arg2: i32) -> (i32, i32, i32) {
    %c0_i32 = arith.constant 0 : i32
    %c0_i32_0 = arith.constant 0 : i32
    %c0_i32_1 = arith.constant 0 : i32
    return %arg2, %c0_i32, %c0_i32_0 : i32, i32, i32
  }
  func.func @transform_2(%arg0: i32, %arg1: i32, %arg2: i32) -> (i32, i32, i32) {
    %c0_i32 = arith.constant 0 : i32
    %c0_i32_0 = arith.constant 0 : i32
    %c0_i32_1 = arith.constant 0 : i32
    return %arg2, %c0_i32, %c0_i32_0 : i32, i32, i32
  }
  func.func @transform_3(%arg0: i32, %arg1: i32, %arg2: i32) -> (i32, i32, i32) {
    %c0_i32 = arith.constant 0 : i32
    %c0_i32_0 = arith.constant 0 : i32
    %c0_i32_1 = arith.constant 0 : i32
    return %arg2, %c0_i32, %c0_i32_0 : i32, i32, i32
  }
  func.func @transform_4(%arg0: i32, %arg1: i32, %arg2: i32) -> (i32, i32, i32) {
    %c0_i32 = arith.constant 0 : i32
    %c0_i32_0 = arith.constant 0 : i32
    %c0_i32_1 = arith.constant 0 : i32
    return %arg2, %c0_i32, %c0_i32_0 : i32, i32, i32
  }
  func.func @transform_5(%arg0: i32, %arg1: i32, %arg2: i32) -> (i32, i32, i32, i32) {
    %c0_i32 = arith.constant 0 : i32
    %c0_i32_0 = arith.constant 0 : i32
    return %arg0, %arg2, %arg1, %c0_i32 : i32, i32, i32, i32
  }
  func.func @transform_6(%arg0: i32, %arg1: i32, %arg2: i32) -> (i32, i32, i32, i32) {
    %c0_i32 = arith.constant 0 : i32
    %c0_i32_0 = arith.constant 0 : i32
    return %arg0, %arg2, %arg1, %c0_i32 : i32, i32, i32, i32
  }
}

</mosaic_0001>

<llo_original>
// kernel: tpu_custom_call.1
$region0: #{tpu_custom_call.1}
  #allocation0 [shape = 'u32[]', space=smem, size = 0x4, offset = 0x4, fixed_abs, tag = 'smem constant byte address 0x4 - core index']
  #allocation1 [shape = 'u32[72,128]{1,0:T(1,128)}', space=vmem, size = 0x9000, scoped, tag = 'internal scratch']
  %s0 = inlined_call_operand.vmem [shape: f32[2,8,32], index: 0, kind: input, shape index: {}]
  %s1 = inlined_call_operand.vmem [shape: bf16[4,32,8], index: 1, kind: input, shape index: {}]
  %s2 = inlined_call_operand.vmem [shape: f32[4,1,8], index: 2, kind: input, shape index: {}]
  %s3 = inlined_call_operand.vmem [shape: f32[4,1,32], index: 3, kind: input, shape index: {}]
  %s4 = inlined_call_operand.vmem [shape: f32[4,1,1], index: 4, kind: input, shape index: {}]
  %s5 = inlined_call_operand.hbm [shape: bf16[2,4,8,8], index: 5, kind: output, shape index: {0}]
  %s6 = inlined_call_operand.vmem [shape: f32[2,4,8,1], index: 6, kind: output, shape index: {1}]
  %7 = xla_tuple %s5, %s6
  %s8 = sld [smem:[#allocation0]]
  $region61: #{tpu_custom_call.1} parent=0
    _
  %s10 = ssub.s32 1, %s8
  %s11 = scalar_select 0, %s10, %s8
  $region1: #{tpu_custom_call.1} parent=0
    #allocation2 [shape = 'u8[4096]{0}', space=vmem, size = 0x1000, scoped, tag = 'output window, operand 0']
    #allocation3 [shape = 's32[2]{0}', space=sflag, size = 0x8, scoped, tag = 'scoped memory for tpu_custom_call.1']
    %12 = vsyncpa [#allocation3], 0
    %s13 = scalar_lea.sflag [#allocation3], 1
    %14 = vsyncpa %s13, 0
    loop: start=0, step=1, limit=10
    $region2: #{tpu_custom_call.1} parent=1 // loop_pre_header
      _
    $region3: #{tpu_custom_call.1} parent=1 // loop_header
      %s16 = sphi 0, %s20
      %p17 = scmp.ge.s32.totalorder %s16, 10
      %s23 = sphi 0, %s42
      %s24 = sphi 0, %s38
      %s25 = sphi 0, %s34
      %s26 = sphi 0, %s23
      %s27 = sphi 0, %s24
      %s28 = sphi 0, %s25
      %s29 = sphi 0, %s26
      %s30 = sphi 0, %s27
      %s31 = sphi 0, %s28
      %s47 = sphi 0, %s49
      %s50 = sphi 0, %s47
      %s51 = sphi 0, %s50
      %s67 = sphi 0, %s51
      %s73 = sphi 0, %s75
      %s76 = sphi 0, %s73
      %s77 = sphi 0, %s76
      %s93 = sphi 0, %s77
      %s99 = sphi 0, %s101
      %s102 = sphi 0, %s99
      %s103 = sphi 0, %s102
      %s119 = sphi 0, %s103
      %s125 = sphi 0, %s127
      %s128 = sphi 0, %s125
      %s129 = sphi 0, %s128
      %s145 = sphi 0, %s129
      %s151 = sphi 0, %s153
      %s154 = sphi 0, %s151
      %s155 = sphi 0, %s154
      %s171 = sphi 0, %s155
      %s181 = sphi 0, %s183
      %s184 = sphi 0, %s181
      %s185 = sphi 0, %s184
      %s201 = sphi 0, %s185
      %s211 = sphi 0, %s213
      %s214 = sphi 0, %s211
      %s215 = sphi 0, %s214
      %s231 = sphi 0, %s215
    $region4: #{tpu_custom_call.1} parent=1 // loop_header_branch
      %19 = sbr.rel (%p17) target = $region8
    $region5: #{tpu_custom_call.1} parent=1 // loop_body
      %s21 = ssub.s32 %s16, 1
      %s22 = ssub.s32 %s16, 2
      %s32 = sadd.s32 1, %s25
      %p33 = scmp.ge.s32.totalorder %s32, 4
      %s34 = scalar_select %p33, 0, %s32
      %s35 = sadd.s32 1, %s24
      %s36 = scalar_select %p33, %s35, %s24
      %p37 = scmp.ge.s32.totalorder %s36, 1
      %s38 = scalar_select %p37, 0, %s36
      %s39 = sadd.s32 1, %s23
      %s40 = scalar_select %p37, %s39, %s23
      %p41 = scmp.ge.s32.totalorder %s40, 2
      %s42 = scalar_select %p41, 0, %s40
      %s43 = ssub.s32 %s23, %s42
      %s44 = ssub.s32 %s24, %s38
      %s45 = sor.u32 %s43, %s44
      %p46 = scmp.eq.s32.totalorder %s45, 0
      %s48 = sadd.s32 %s47, 1
      %s49 = scalar_select %p46, %s47, %s48
      %p52 = pneg %p46
      %p53 = scmp.eq.s32.totalorder %s16, 7
      %p54 = por %p52, %p53
      %p55 = scmp.ne.s32.totalorder %s47, %s50
      %p56 = scmp.eq.s32.totalorder %s16, 0
      %p57 = por %p55, %p56
      %p58 = scmp.ne.s32.totalorder %s47, %s50
      %p59 = scmp.eq.s32.totalorder %s21, 7
      %p60 = por %p58, %p59
      %p61 = scmp.ne.s32.totalorder %s50, %s51
      %p62 = scmp.eq.s32.totalorder %s21, 0
      %p63 = por %p61, %p62
      %p64 = scmp.ne.s32.totalorder %s50, %s51
      %p65 = scmp.eq.s32.totalorder %s22, 7
      %p66 = por %p64, %p65
      %p68 = scmp.ne.s32.totalorder %s51, %s67
      %p69 = scmp.eq.s32.totalorder %s22, 0
      %p70 = por %p68, %p69
      %s71 = ssub.s32 %s25, %s34
      %p72 = scmp.eq.s32.totalorder %s71, 0
      %s74 = sadd.s32 %s73, 1
      %s75 = scalar_select %p72, %s73, %s74
      %p78 = pneg %p72
      %p79 = scmp.eq.s32.totalorder %s16, 7
      %p80 = por %p78, %p79
      %p81 = scmp.ne.s32.totalorder %s73, %s76
      %p82 = scmp.eq.s32.totalorder %s16, 0
      %p83 = por %p81, %p82
      %p84 = scmp.ne.s32.totalorder %s73, %s76
      %p85 = scmp.eq.s32.totalorder %s21, 7
      %p86 = por %p84, %p85
      %p87 = scmp.ne.s32.totalorder %s76, %s77
      %p88 = scmp.eq.s32.totalorder %s21, 0
      %p89 = por %p87, %p88
      %p90 = scmp.ne.s32.totalorder %s76, %s77
      %p91 = scmp.eq.s32.totalorder %s22, 7
      %p92 = por %p90, %p91
      %p94 = scmp.ne.s32.totalorder %s77, %s93
      %p95 = scmp.eq.s32.totalorder %s22, 0
      %p96 = por %p94, %p95
      %s97 = ssub.s32 %s25, %s34
      %p98 = scmp.eq.s32.totalorder %s97, 0
      %s100 = sadd.s32 %s99, 1
      %s101 = scalar_select %p98, %s99, %s100
      %p104 = pneg %p98
      %p105 = scmp.eq.s32.totalorder %s16, 7
      %p106 = por %p104, %p105
      %p107 = scmp.ne.s32.totalorder %s99, %s102
      %p108 = scmp.eq.s32.totalorder %s16, 0
      %p109 = por %p107, %p108
      %p110 = scmp.ne.s32.totalorder %s99, %s102
      %p111 = scmp.eq.s32.totalorder %s21, 7
      %p112 = por %p110, %p111
      %p113 = scmp.ne.s32.totalorder %s102, %s103
      %p114 = scmp.eq.s32.totalorder %s21, 0
      %p115 = por %p113, %p114
      %p116 = scmp.ne.s32.totalorder %s102, %s103
      %p117 = scmp.eq.s32.totalorder %s22, 7
      %p118 = por %p116, %p117
      %p120 = scmp.ne.s32.totalorder %s103, %s119
      %p121 = scmp.eq.s32.totalorder %s22, 0
      %p122 = por %p120, %p121
      %s123 = ssub.s32 %s25, %s34
      %p124 = scmp.eq.s32.totalorder %s123, 0
      %s126 = sadd.s32 %s125, 1
      %s127 = scalar_select %p124, %s125, %s126
      %p130 = pneg %p124
      %p131 = scmp.eq.s32.totalorder %s16, 7
      %p132 = por %p130, %p131
      %p133 = scmp.ne.s32.totalorder %s125, %s128
      %p134 = scmp.eq.s32.totalorder %s16, 0
      %p135 = por %p133, %p134
      %p136 = scmp.ne.s32.totalorder %s125, %s128
      %p137 = scmp.eq.s32.totalorder %s21, 7
      %p138 = por %p136, %p137
      %p139 = scmp.ne.s32.totalorder %s128, %s129
      %p140 = scmp.eq.s32.totalorder %s21, 0
      %p141 = por %p139, %p140
      %p142 = scmp.ne.s32.totalorder %s128, %s129
      %p143 = scmp.eq.s32.totalorder %s22, 7
      %p144 = por %p142, %p143
      %p146 = scmp.ne.s32.totalorder %s129, %s145
      %p147 = scmp.eq.s32.totalorder %s22, 0
      %p148 = por %p146, %p147
      %s149 = ssub.s32 %s25, %s34
      %p150 = scmp.eq.s32.totalorder %s149, 0
      %s152 = sadd.s32 %s151, 1
      %s153 = scalar_select %p150, %s151, %s152
      %p156 = pneg %p150
      %p157 = scmp.eq.s32.totalorder %s16, 7
      %p158 = por %p156, %p157
      %p159 = scmp.ne.s32.totalorder %s151, %s154
      %p160 = scmp.eq.s32.totalorder %s16, 0
      %p161 = por %p159, %p160
      %p162 = scmp.ne.s32.totalorder %s151, %s154
      %p163 = scmp.eq.s32.totalorder %s21, 7
      %p164 = por %p162, %p163
      %p165 = scmp.ne.s32.totalorder %s154, %s155
      %p166 = scmp.eq.s32.totalorder %s21, 0
      %p167 = por %p165, %p166
      %p168 = scmp.ne.s32.totalorder %s154, %s155
      %p169 = scmp.eq.s32.totalorder %s22, 7
      %p170 = por %p168, %p169
      %p172 = scmp.ne.s32.totalorder %s155, %s171
      %p173 = scmp.eq.s32.totalorder %s22, 0
      %p174 = por %p172, %p173
      %s175 = ssub.s32 %s23, %s42
      %s176 = ssub.s32 %s25, %s34
      %s177 = sor.u32 %s175, %s176
      %s178 = ssub.s32 %s24, %s38
      %s179 = sor.u32 %s177, %s178
      %p180 = scmp.eq.s32.totalorder %s179, 0
      %s182 = sadd.s32 %s181, 1
      %s183 = scalar_select %p180, %s181, %s182
      %p186 = pneg %p180
      %p187 = scmp.eq.s32.totalorder %s16, 7
      %p188 = por %p186, %p187
      %p189 = scmp.ne.s32.totalorder %s181, %s184
      %p190 = scmp.eq.s32.totalorder %s16, 0
      %p191 = por %p189, %p190
      %p192 = scmp.ne.s32.totalorder %s181, %s184
      %p193 = scmp.eq.s32.totalorder %s21, 7
      %p194 = por %p192, %p193
      %p195 = scmp.ne.s32.totalorder %s184, %s185
      %p196 = scmp.eq.s32.totalorder %s21, 0
      %p197 = por %p195, %p196
      %p198 = scmp.ne.s32.totalorder %s184, %s185
      %p199 = scmp.eq.s32.totalorder %s22, 7
      %p200 = por %p198, %p199
      %p202 = scmp.ne.s32.totalorder %s185, %s201
      %p203 = scmp.eq.s32.totalorder %s22, 0
      %p204 = por %p202, %p203
      %s205 = ssub.s32 %s23, %s42
      %s206 = ssub.s32 %s25, %s34
      %s207 = sor.u32 %s205, %s206
      %s208 = ssub.s32 %s24, %s38
      %s209 = sor.u32 %s207, %s208
      %p210 = scmp.eq.s32.totalorder %s209, 0
      %s212 = sadd.s32 %s211, 1
      %s213 = scalar_select %p210, %s211, %s212
      %p216 = pneg %p210
      %p217 = scmp.eq.s32.totalorder %s16, 7
      %p218 = por %p216, %p217
      %p219 = scmp.ne.s32.totalorder %s211, %s214
      %p220 = scmp.eq.s32.totalorder %s16, 0
      %p221 = por %p219, %p220
      %p222 = scmp.ne.s32.totalorder %s211, %s214
      %p223 = scmp.eq.s32.totalorder %s21, 7
      %p224 = por %p222, %p223
      %p225 = scmp.ne.s32.totalorder %s214, %s215
      %p226 = scmp.eq.s32.totalorder %s21, 0
      %p227 = por %p225, %p226
      %p228 = scmp.ne.s32.totalorder %s214, %s215
      %p229 = scmp.eq.s32.totalorder %s22, 7
      %p230 = por %p228, %p229
      %p232 = scmp.ne.s32.totalorder %s215, %s231
      %p233 = scmp.eq.s32.totalorder %s22, 0
      %p234 = por %p232, %p233
      %p235 = scmp.le.s32.totalorder 1, %s16
      %p236 = scmp.lt.s32.totalorder %s16, 9
      %p237 = pnand %p235, %p236
      %p238 = pneg %p237
      // Predicated region
      $region9: #{tpu_custom_call.1} parent=5 // pred_check
        _
      $region10: #{tpu_custom_call.1} parent=5 // pred_check_branch
        %240 = sbr.rel (%p237) target = $region12
      $region11: #{tpu_custom_call.1} parent=5 // pred_region
        %s241 = ssub.s32 %s16, 1
      $region12: #{tpu_custom_call.1} parent=5 // pred_fallthru
        _
      %p242 = scmp.lt.s32.totalorder %s16, 8
      // Predicated region
      $region13: #{tpu_custom_call.1} parent=5 // pred_check
        %p243 = pneg %p242
      $region14: #{tpu_custom_call.1} parent=5 // pred_check_branch
        %245 = sbr.rel (%p243) target = $region16
      $region15: #{tpu_custom_call.1} parent=5 // pred_region
        // Predicated region
        $region17: #{tpu_custom_call.1} parent=15 // pred_check
          %p246 = pneg %p57
        $region18: #{tpu_custom_call.1} parent=15 // pred_check_branch
          %248 = sbr.rel (%p246) target = $region20
        $region19: #{tpu_custom_call.1} parent=15 // pred_region
          %p249 = scmp.lt.s32.totalorder %s23, 1
          %s250 = scalar_select %p249, %s23, 1
          %p251 = scmp.lt.s32.totalorder %s24, 0
          %s252 = scalar_select %p251, %s24, 0
          %s253 = sadd.s32 %s252, %s250
          %s254 = smul.addr %s253, 8
          %s255 = scalar_lea.vmem %s0, %s254
        $region20: #{tpu_custom_call.1} parent=15 // pred_fallthru
          _
        // Predicated region
        $region21: #{tpu_custom_call.1} parent=15 // pred_check
          %p256 = pneg %p83
        $region22: #{tpu_custom_call.1} parent=15 // pred_check_branch
          %258 = sbr.rel (%p256) target = $region24
        $region23: #{tpu_custom_call.1} parent=15 // pred_region
          %p259 = scmp.lt.s32.totalorder %s25, 3
          %s260 = scalar_select %p259, %s25, 3
          %s261 = smul.addr %s260, 4
          %s262 = smul.addr %s261, 4
          %s263 = scalar_lea.vmem %s1, %s262
        $region24: #{tpu_custom_call.1} parent=15 // pred_fallthru
          _
        // Predicated region
        $region25: #{tpu_custom_call.1} parent=15 // pred_check
          %p264 = pneg %p109
        $region26: #{tpu_custom_call.1} parent=15 // pred_check_branch
          %266 = sbr.rel (%p264) target = $region28
        $region27: #{tpu_custom_call.1} parent=15 // pred_region
          %p267 = scmp.lt.s32.totalorder %s25, 3
          %s268 = scalar_select %p267, %s25, 3
          %s269 = scalar_lea.vmem %s2, %s268
        $region28: #{tpu_custom_call.1} parent=15 // pred_fallthru
          _
        // Predicated region
        $region29: #{tpu_custom_call.1} parent=15 // pred_check
          %p270 = pneg %p135
        $region30: #{tpu_custom_call.1} parent=15 // pred_check_branch
          %272 = sbr.rel (%p270) target = $region32
        $region31: #{tpu_custom_call.1} parent=15 // pred_region
          %p273 = scmp.lt.s32.totalorder %s25, 3
          %s274 = scalar_select %p273, %s25, 3
          %s275 = scalar_lea.vmem %s3, %s274
        $region32: #{tpu_custom_call.1} parent=15 // pred_fallthru
          _
        // Predicated region
        $region33: #{tpu_custom_call.1} parent=15 // pred_check
          %p276 = pneg %p161
        $region34: #{tpu_custom_call.1} parent=15 // pred_check_branch
          %278 = sbr.rel (%p276) target = $region36
        $region35: #{tpu_custom_call.1} parent=15 // pred_region
          %p279 = scmp.lt.s32.totalorder %s25, 3
          %s280 = scalar_select %p279, %s25, 3
          %s281 = scalar_lea.vmem %s4, %s280
        $region36: #{tpu_custom_call.1} parent=15 // pred_fallthru
          _
      $region16: #{tpu_custom_call.1} parent=5 // pred_fallthru
        _
      %p282 = scmp.le.s32.totalorder 1, %s16
      %p283 = scmp.lt.s32.totalorder %s16, 9
      %p284 = pnand %p282, %p283
      %p285 = pneg %p284
      // Predicated region
      $region37: #{tpu_custom_call.1} parent=5 // pred_check
        _
      $region38: #{tpu_custom_call.1} parent=5 // pred_check_branch
        %287 = sbr.rel (%p284) target = $region40
      $region39: #{tpu_custom_call.1} parent=5 // pred_region
        %s288 = ssub.s32 %s16, 1
        %p289 = scmp.lt.s32.totalorder %s26, 1
        %s290 = scalar_select %p289, %s26, 1
        %p291 = scmp.lt.s32.totalorder %s27, 0
        %s292 = scalar_select %p291, %s27, 0
        %s293 = sadd.s32 %s292, %s290
        %s294 = smul.addr %s293, 8
        %s295 = scalar_lea.vmem %s0, %s294
        %p296 = pneg %p63
        %p297 = pneg %p60
        %p298 = scmp.lt.s32.totalorder %s28, 3
        %s299 = scalar_select %p298, %s28, 3
        %s300 = smul.addr %s299, 4
        %s301 = smul.addr %s300, 4
        %s302 = scalar_lea.vmem %s1, %s301
        %p303 = pneg %p89
        %p304 = pneg %p86
        %p305 = scmp.lt.s32.totalorder %s28, 3
        %s306 = scalar_select %p305, %s28, 3
        %s307 = scalar_lea.vmem %s2, %s306
        %p308 = pneg %p115
        %p309 = pneg %p112
        %p310 = scmp.lt.s32.totalorder %s28, 3
        %s311 = scalar_select %p310, %s28, 3
        %s312 = scalar_lea.vmem %s3, %s311
        %p313 = pneg %p141
        %p314 = pneg %p138
        %p315 = scmp.lt.s32.totalorder %s28, 3
        %s316 = scalar_select %p315, %s28, 3
        %s317 = scalar_lea.vmem %s4, %s316
        %p318 = pneg %p167
        %p319 = pneg %p164
        %p320 = pneg %p197
        %p321 = pneg %p194
        %s322 = sand.u32 %s184, 1
        %s323 = scalar_lea.sflag [#allocation3], %s322
        %s324 = sand.u32 %s184, 1
        %s325 = smul.addr %s324, 4
        %s326 = scalar_lea.vmem [#allocation2], %s325
        %p327 = pneg %p227
        %p328 = pneg %p224
        %p329 = scmp.lt.s32.totalorder %s26, 1
        %s330 = scalar_select %p329, %s26, 1
        %p331 = scmp.lt.s32.totalorder %s28, 3
        %s332 = scalar_select %p331, %s28, 3
        %p333 = scmp.lt.s32.totalorder %s27, 0
        %s334 = scalar_select %p333, %s27, 0
        %s335 = sadd.s32 %s334, %s332
        %s336 = smul.addr %s330, 4
        %s337 = sadd.s32 %s335, %s336
        %s338 = smul.addr %s337, 8
        %s339 = scalar_lea.vmem %s6, %s338
        %p340 = scmp.lt.s32.totalorder %s26, 1
        %s341 = scalar_select %p340, %s26, 1
        %p342 = scmp.lt.s32.totalorder %s27, 0
        %s343 = scalar_select %p342, %s27, 0
        %s344 = sadd.s32 %s343, %s341
        %s345 = smul.addr %s344, 8
        %s346 = scalar_lea.vmem %s0, %s345
        %p347 = scmp.lt.s32.totalorder %s28, 3
        %s348 = scalar_select %p347, %s28, 3
        %s349 = smul.addr %s348, 4
        %s350 = smul.addr %s349, 4
        %s351 = scalar_lea.vmem %s1, %s350
        %p352 = scmp.lt.s32.totalorder %s28, 3
        %s353 = scalar_select %p352, %s28, 3
        %s354 = scalar_lea.vmem %s2, %s353
        %p355 = scmp.lt.s32.totalorder %s28, 3
        %s356 = scalar_select %p355, %s28, 3
        %s357 = scalar_lea.vmem %s3, %s356
        %p358 = scmp.lt.s32.totalorder %s28, 3
        %s359 = scalar_select %p358, %s28, 3
        %s360 = scalar_lea.vmem %s4, %s359
        %p361 = scmp.lt.s32.totalorder %s26, 1
        %s362 = scalar_select %p361, %s26, 1
        %p363 = scmp.lt.s32.totalorder %s28, 3
        %s364 = scalar_select %p363, %s28, 3
        %p365 = scmp.lt.s32.totalorder %s27, 0
        %s366 = scalar_select %p365, %s27, 0
        %s367 = sadd.s32 %s366, %s364
        %s368 = smul.addr %s362, 4
        %s369 = sadd.s32 %s367, %s368
        %s370 = smul.addr %s369, 8
        %s371 = scalar_lea.vmem %s6, %s370
        %v373 = vld [vmem:[%s346] sm:$0xff]
        %v374 = vpack.c.bf16 %v373, %v373
        %v375 = vld [vmem:[%s351] sm:$0xf]
        %v376 = vld [vmem:[%s351 + $0x4] sm:$0xf]
        %v377 = vld [vmem:[%s351 + $0x8] sm:$0xf]
        %v378 = vld [vmem:[%s351 + $0xc] sm:$0xf]
        %v379 = vld [vmem:[%s354] sm:$0x1]
        %v381 = vperm.slane %v379, 0
        %v387 = vunpack.c.l.b16 %v375
        %v388 = vunpack.c.l.b16 %v376
        %v389 = vunpack.c.l.b16 %v377
        %v390 = vunpack.c.l.b16 %v378
        %v391 = vpack.c.b16 %v388, %v387
        %v392 = vpack.c.b16 %v390, %v389
        %vm395 = vcmask 261120
        %v397 = vsel %vm395, %v374, 0
        %399 = vmatpush.bf16.msra.mxu0 0
        %400 = vmatpush.bf16.msra.mxu0 0
        %401 = vmatpush.bf16.msra.mxu0 0
        %402 = vmatpush.bf16.msra.mxu0 0
        %403 = vmatpush.bf16.msra.mxu0 0
        %404 = vmatpush.bf16.msra.mxu0 0
        %405 = vmatpush.bf16.msra.mxu0 %v392
        %406 = vmatpush.bf16.msra.mxu0 %v391
        %407 = vmatmul.bf16.gmra.mxu0 %v397
        %v408 = vpop.f32.mrf.mxu0
        %v409 = vadd.f32 %v381, %v408
        %v410 = vpop.f32.mrf.mxu0
        %411 = vdwg.mxu0
        %v412 = vpack.c.bf16 %v409, %v409
        %vm413 = vcmask 60416
        %414 = vst.msk [vmem:[%s326] sm:$0xf] %vm413, %v412
        %v415 = vld [vmem:[%s357] sm:$0x1]
        %v417 = vperm.slane %v415, 0
        %v419 = vmul.f32 %v373, %v417
        %v420 = vsel %vm395, %v419, 0.0
        %421 = vadd.xlane.f32.xlu0 %v420
        %v422 = vpop.xlane.xlu0 %421
        %v423 = vld [vmem:[%s360] sm:$0x1]
        %v425 = vperm.slane %v423, 0
        %v427 = vadd.f32 %v422, %v425
        %vm428 = vcmask 7168
        %429 = vst.msk [vmem:[%s371] sm:$0xff] %vm428, %v427
        %s430 = sand.u32 %s184, 1
        %s431 = scalar_lea.sflag [#allocation3], %s430
        %s432 = sand.u32 %s184, 1
        %s433 = smul.addr %s432, 4
        %s434 = scalar_lea.vmem [#allocation2], %s433
        %p435 = scmp.lt.s32.totalorder %s26, 1
        %s436 = scalar_select %p435, %s26, 1
        %p437 = scmp.lt.s32.totalorder %s28, 3
        %s438 = scalar_select %p437, %s28, 3
        %p439 = scmp.lt.s32.totalorder %s27, 0
        %s440 = scalar_select %p439, %s27, 0
        %s441 = sadd.s32 %s440, %s438
        %s442 = smul.addr %s436, 4
        %s443 = sadd.s32 %s441, %s442
        %s444 = smul.addr %s443, 8
        %s445 = scalar_lea.vmem %s6, %s444
        // Predicated region
        $region41: #{tpu_custom_call.1} parent=39 // pred_check
          %p446 = pneg %p194
        $region42: #{tpu_custom_call.1} parent=39 // pred_check_branch
          %448 = sbr.rel (%p446) target = $region44
        $region43: #{tpu_custom_call.1} parent=39 // pred_region
          %450 = vsyncadd %s431, 0
          %s451 = sadd.s32 %s27, %s28
          %s452 = smul.addr %s26, 4
          %s453 = sadd.s32 %s451, %s452
          %s454 = smul.addr %s453, 4
          %s455 = scalar_lea.hbm %s5, %s454
          %s457 = sshll.u32 %s434, 4
          %s458 = int_to_ptr.vmem [resolvable:$true] %s457
          %s459 = sshll.u32 %s455, 4
          %s460 = int_to_ptr.hbm [resolvable:$true] %s459
          %462 = dma.vmem_to_hbm [thread:$0]  %s458, 64, %s460, %s431
        $region44: #{tpu_custom_call.1} parent=39 // pred_fallthru
          _
        // Predicated region
        $region45: #{tpu_custom_call.1} parent=39 // pred_check
          %p463 = pneg %p224
        $region46: #{tpu_custom_call.1} parent=39 // pred_check_branch
          %465 = sbr.rel (%p463) target = $region48
        $region47: #{tpu_custom_call.1} parent=39 // pred_region
          _
        $region48: #{tpu_custom_call.1} parent=39 // pred_fallthru
          _
      $region40: #{tpu_custom_call.1} parent=5 // pred_fallthru
        _
      %p466 = scmp.le.s32.totalorder 2, %s16
      // Predicated region
      $region49: #{tpu_custom_call.1} parent=5 // pred_check
        %p467 = pneg %p466
      $region50: #{tpu_custom_call.1} parent=5 // pred_check_branch
        %469 = sbr.rel (%p467) target = $region52
      $region51: #{tpu_custom_call.1} parent=5 // pred_region
        %s470 = ssub.s32 %s16, 2
        // Predicated region
        $region53: #{tpu_custom_call.1} parent=51 // pred_check
          %p471 = pneg %p200
        $region54: #{tpu_custom_call.1} parent=51 // pred_check_branch
          %473 = sbr.rel (%p471) target = $region56
        $region55: #{tpu_custom_call.1} parent=51 // pred_region
          %s474 = sand.u32 %s185, 1
          %s475 = scalar_lea.sflag [#allocation3], %s474
          %s476 = sand.u32 %s185, 1
          %s477 = smul.addr %s476, 4
          %s478 = scalar_lea.vmem [#allocation2], %s477
          %480 = dma.done %s475, 64
        $region56: #{tpu_custom_call.1} parent=51 // pred_fallthru
          _
        // Predicated region
        $region57: #{tpu_custom_call.1} parent=51 // pred_check
          %p481 = pneg %p230
        $region58: #{tpu_custom_call.1} parent=51 // pred_check_branch
          %483 = sbr.rel (%p481) target = $region60
        $region59: #{tpu_custom_call.1} parent=51 // pred_region
          %p484 = scmp.lt.s32.totalorder %s29, 1
          %s485 = scalar_select %p484, %s29, 1
          %p486 = scmp.lt.s32.totalorder %s31, 3
          %s487 = scalar_select %p486, %s31, 3
          %p488 = scmp.lt.s32.totalorder %s30, 0
          %s489 = scalar_select %p488, %s30, 0
          %s490 = sadd.s32 %s489, %s487
          %s491 = smul.addr %s485, 4
          %s492 = sadd.s32 %s490, %s491
          %s493 = smul.addr %s492, 8
          %s494 = scalar_lea.vmem %s6, %s493
        $region60: #{tpu_custom_call.1} parent=51 // pred_fallthru
          _
      $region52: #{tpu_custom_call.1} parent=5 // pred_fallthru
        _
    $region6: #{tpu_custom_call.1} parent=1 // loop_footer
      %s20 = sadd.s32 1, %s16
    $region7: #{tpu_custom_call.1} parent=1 // loop_footer_branch
      %15 = sbr.rel target = $region3
    $region8: #{tpu_custom_call.1} parent=1 // loop_exit
      _
    %495 = vsyncpa [#allocation3], 1
    %s496 = scalar_lea.sflag [#allocation3], 1
    %497 = vsyncpa %s496, 1

</llo_original>
